<compile_context>
chip_gen: v7x
topology: tpu7x:2x2x1
jax: 0.10.0
libtpu: 0.0.40
codegen_flags: <defaults>
</compile_context>

<pallas_src>
import jax
import jax.numpy as jnp
from jax.experimental import pallas as pl
from jax.experimental.pallas import tpu as pltpu


def _copy_kernel(x_ref, o_ref):
    # Identity copy of one VMEM tile (the only "compute" in a view/reshape).
    o_ref[...] = x_ref[...]


def _resolve_target_shape(target_shape, total_elems):
    """Resolve a single -1 in target_shape like torch.view does."""
    shape = list(target_shape)
    if -1 in shape:
        idx = shape.index(-1)
        known = 1
        for i, d in enumerate(shape):
            if i != idx:
                known *= int(d)
        assert known > 0 and total_elems % known == 0, "incompatible target_shape"
        shape[idx] = total_elems // known
    prod = 1
    for d in shape:
        prod *= int(d)
    assert prod == total_elems, "incompatible target_shape"
    return tuple(int(d) for d in shape)


_TILE_TARGET_BYTES = 8 * 1024 * 1024   # per-buffer tile (x4 in-flight buffers)
_VMEM_LIMIT_BYTES = 48 * 1024 * 1024   # < 64 MiB per-TC VMEM on v7x, with headroom


def _plan_tiles(total, itemsize):
    """Pick a lane-dense (rows, lane) view of the flat data and a row-tile size."""
    lane = None
    for cand in (1024, 512, 256, 128):
        if total % cand == 0:
            lane = cand
            break
    if lane is None:
        return None
    rows = total // lane
    # Sublane packing: 8 rows for 4-byte dtypes, 16 for 2-byte, 32 for 1-byte.
    pack = max(8, 32 // max(1, itemsize))
    if rows < pack:
        # Tiny input: one full-dim block (always a legal block shape).
        return rows, lane, rows

    # Target ~8 MiB tiles, rounded down to a pack multiple.
    target_rows = max(pack, (_TILE_TARGET_BYTES // (lane * itemsize)) // pack * pack)
    max_rows = (rows // pack) * pack
    # Keep at least 2 grid steps when possible so v7x's 2 TCs can both work.
    if rows >= 2 * pack:
        max_rows = max(pack, min(max_rows, ((rows // 2) // pack) * pack))
    tile_rows = max(pack, min(target_rows, max_rows))

    # Prefer an exact divisor of rows (no masked partial final block); bounded
    # downward search in pack-sized steps.
    for cand in range(tile_rows, pack - 1, -pack):
        if rows % cand == 0:
            tile_rows = cand
            break
        if tile_rows - cand >= 64 * pack:
            break
    return rows, lane, tile_rows


def _tiled_copy(x2d, rows, lane, tile_rows):
    grid_r = pl.cdiv(rows, tile_rows)
    itemsize = jnp.dtype(x2d.dtype).itemsize
    total = rows * lane
    return pl.pallas_call(
        _copy_kernel,
        out_shape=jax.ShapeDtypeStruct((rows, lane), x2d.dtype),
        grid=(grid_r,),
        in_specs=[pl.BlockSpec((tile_rows, lane), lambda i: (i, 0))],
        out_specs=pl.BlockSpec((tile_rows, lane), lambda i: (i, 0)),
        cost_estimate=pl.CostEstimate(
            flops=0, transcendentals=0, bytes_accessed=2 * total * itemsize),
        compiler_params=pltpu.CompilerParams(
            dimension_semantics=("parallel",),
            vmem_limit_bytes=_VMEM_LIMIT_BYTES,
        ),
    )(x2d)


def unflatten(x, target_shape):
    """Default UnFlatten.forward: metadata-only, exactly torch .view for contiguous x."""
    out_shape = _resolve_target_shape(target_shape, int(x.size))
    return jnp.reshape(x, out_shape)


def unflatten_copy(x, target_shape):
    """UnFlatten that materializes a fresh output buffer via a Pallas copy kernel."""
    total = int(x.size)
    out_shape = _resolve_target_shape(target_shape, total)
    itemsize = jnp.dtype(x.dtype).itemsize

    plan = _plan_tiles(total, itemsize)
    if plan is None:
        # Element count not a multiple of 128: a physical copy would need a
        # ragged-tail path; semantically the view needs no copy, so return the
        # metadata-only reshape instead of risking a giant single-block tile.
        # TODO(synk): ragged-tail copy path for non-128-divisible sizes.
        return jnp.reshape(x, out_shape)

    rows, lane, tile_rows = plan
    x2d = jnp.reshape(x, (rows, lane))            # metadata-only re-view
    copied = _tiled_copy(x2d, rows, lane, tile_rows)
    return jnp.reshape(copied, out_shape)         # metadata-only re-view


class UnFlatten:
    """JAX/Pallas port of the PyTorch UnFlatten module (no parameters)."""

    def __init__(self, target_shape, materialize=False):
        self.target_shape = tuple(target_shape)
        self.materialize = materialize

    def __call__(self, x):
        if self.materialize:
            return unflatten_copy(x, self.target_shape)
        return unflatten(x, self.target_shape)


if __name__ == "__main__":
    key = jax.random.PRNGKey(0)
    k1, k2 = jax.random.split(key)

    # 1) Typical VAE decoder usage: flat latent features -> (B, C, H, W).
    #    Default path: metadata-only view (the recommended fast path).
    x1 = jax.random.normal(k1, (2, 1024), dtype=jnp.float32)
    y1 = jax.block_until_ready(UnFlatten((-1, 64, 4, 4))(x1))
    assert y1.shape == (2, 64, 4, 4) and y1.dtype == x1.dtype
    assert bool(jnp.array_equal(y1, jnp.reshape(x1, (2, 64, 4, 4))))

    # 1b) Same input through the materializing Pallas copy (single full block).
    y1c = jax.block_until_ready(UnFlatten((-1, 64, 4, 4), materialize=True)(x1))
    assert y1c.shape == (2, 64, 4, 4) and y1c.dtype == x1.dtype
    assert bool(jnp.array_equal(y1c, jnp.reshape(x1, (2, 64, 4, 4))))

    # 2) Slab that exercises the tiled, pipelined, parallel-grid copy path
    #    (rows=128, tile_rows=64 -> 2 grid steps, lane=1024).
    x2 = jax.random.normal(k2, (64, 2048), dtype=jnp.float32)
    y2 = jax.block_until_ready(UnFlatten((-1, 32, 8, 8), materialize=True)(x2))
    assert y2.shape == (64, 32, 8, 8) and y2.dtype == x2.dtype
    assert bool(jnp.array_equal(y2, jnp.reshape(x2, (64, 32, 8, 8))))

    print("KERNEL_OK")
</pallas_src>

<mosaic_0001>
module attributes {stable_mosaic.version = 11 : i64} {
  func.func @_copy_kernel(%arg0: i32, %arg1: memref<2x1024xf32, #tpu.memory_space<vmem>>, %arg2: memref<2x1024xf32, #tpu.memory_space<vmem>>) attributes {dimension_semantics = [#tpu.dimension_semantics<parallel>], iteration_bounds = array<i64: 1>, scalar_prefetch = 0 : i64, scratch_operands = 0 : i64, tpu.core_type = #tpu.core_type<tc>, window_params = [{transform_indices = @transform_0, window_bounds = array<i64: 2, 1024>}, {transform_indices = @transform_1, window_bounds = array<i64: 2, 1024>}]} {
    %c0 = arith.constant 0 : index
    %c0_0 = arith.constant 0 : index
    %0 = vector.load %arg1[%c0, %c0_0] : memref<2x1024xf32, #tpu.memory_space<vmem>>, vector<2x1024xf32>
    %c0_1 = arith.constant 0 : index
    %c0_2 = arith.constant 0 : index
    %1 = vector.load %arg2[%c0_1, %c0_2] : memref<2x1024xf32, #tpu.memory_space<vmem>>, vector<2x1024xf32>
    tpu.vector_store %arg2[%c0_1, %c0_2], %0 {strides = array<i32>} : memref<2x1024xf32, #tpu.memory_space<vmem>>, vector<2x1024xf32>,
    return
  }
  func.func @transform_0(%arg0: i32) -> (i32, i32) {
    %c0_i32 = arith.constant 0 : i32
    %c0_i32_0 = arith.constant 0 : i32
    return %arg0, %c0_i32 : i32, i32
  }
  func.func @transform_1(%arg0: i32) -> (i32, i32) {
    %c0_i32 = arith.constant 0 : i32
    %c0_i32_0 = arith.constant 0 : i32
    return %arg0, %c0_i32 : i32, i32
  }
}

</mosaic_0001>

<llo_original>
// kernel: tpu_custom_call.1
$region0: #{tpu_custom_call.1}
  #allocation0 [shape = 'u32[]', space=smem, size = 0x4, offset = 0x4, fixed_abs, tag = 'smem constant byte address 0x4 - core index']
  #allocation1 [shape = 'u32[144,128]{1,0:T(1,128)}', space=vmem, size = 0x12000, scoped, tag = 'internal scratch']
  %s0 = inlined_call_operand.hbm [shape: f32[2,1024], index: 0, kind: input, shape index: {}]
  %s1 = inlined_call_operand.hbm [shape: f32[2,1024], index: 1, kind: output, shape index: {}]
  %s2 = sld [smem:[#allocation0]]
  $region18: #{tpu_custom_call.1} parent=0
    _
  %s4 = ssub.s32 1, %s2
  %s5 = scalar_select 0, %s4, %s2
  $region1: #{tpu_custom_call.1} parent=0
    #allocation2 [shape = 'u8[8192]{0}', space=vmem, size = 0x2000, scoped, tag = 'input window, operand 0, single buffered']
    #allocation3 [shape = 's32[1]{0}', space=sflag, size = 0x4, scoped, tag = 'scoped memory for tpu_custom_call.1']
    #allocation4 [shape = 's32[1]{0}', space=sflag, size = 0x4, scoped, tag = 'scoped memory for tpu_custom_call.1']
    #allocation5 [shape = 'u8[8192]{0}', space=vmem, size = 0x2000, scoped, tag = 'output window, operand 0, single buffered']
    %6 = vsyncpa [#allocation3], 0
    %7 = vsyncpa [#allocation4], 0
    // Predicated region
    $region2: #{tpu_custom_call.1} parent=1 // pred_check
      _
    $region3: #{tpu_custom_call.1} parent=1 // pred_check_branch
      %9 = sbr.rel (0) target = $region5
    $region4: #{tpu_custom_call.1} parent=1 // pred_region
      %s11 = ssub.s32 256, 256
      %12 = vsyncadd [#allocation3], %s11
      %s14 = sshll.u32 [#allocation2], 4
      %s15 = int_to_ptr.vmem [resolvable:$true] %s14
      %17 = dma.hbm_to_vmem [thread:$0]  %s0, 256, %s15, [#allocation3]
    $region5: #{tpu_custom_call.1} parent=1 // pred_fallthru
      _
    // Predicated region
    $region6: #{tpu_custom_call.1} parent=1 // pred_check
      _
    $region7: #{tpu_custom_call.1} parent=1 // pred_check_branch
      %19 = sbr.rel (0) target = $region9
    $region8: #{tpu_custom_call.1} parent=1 // pred_region
      %20 = dma.done [#allocation3], 256
    $region9: #{tpu_custom_call.1} parent=1 // pred_fallthru
      _
    %v21 = vld [vmem:[#allocation2] sm:$0xff]
    %v22 = vld [vmem:[#allocation2 + $0x8] sm:$0xff]
    %23 = vst [vmem:[#allocation5] sm:$0xff] %v21
    %24 = vst [vmem:[#allocation5 + $0x8] sm:$0xff] %v22
    // Predicated region
    $region10: #{tpu_custom_call.1} parent=1 // pred_check
      _
    $region11: #{tpu_custom_call.1} parent=1 // pred_check_branch
      %26 = sbr.rel (0) target = $region13
    $region12: #{tpu_custom_call.1} parent=1 // pred_region
      %s28 = ssub.s32 256, 256
      %29 = vsyncadd [#allocation4], %s28
      %s31 = sshll.u32 [#allocation5], 4
      %s32 = int_to_ptr.vmem [resolvable:$true] %s31
      %34 = dma.vmem_to_hbm [thread:$0]  %s32, 256, %s1, [#allocation4]
    $region13: #{tpu_custom_call.1} parent=1 // pred_fallthru
      _
    // Predicated region
    $region14: #{tpu_custom_call.1} parent=1 // pred_check
      _
    $region15: #{tpu_custom_call.1} parent=1 // pred_check_branch
      %36 = sbr.rel (0) target = $region17
    $region16: #{tpu_custom_call.1} parent=1 // pred_region
      %37 = dma.done [#allocation4], 256
    $region17: #{tpu_custom_call.1} parent=1 // pred_fallthru
      _
    %38 = vsyncpa [#allocation3], 1
    %39 = vsyncpa [#allocation4], 1

</llo_original>
